<compile_context>
chip_gen: v5e
topology: v5e:2x2
jax: 0.10.0
libtpu: 0.0.40
codegen_flags: <defaults>
</compile_context>

<pallas_src>
import functools

import jax
import jax.numpy as jnp
from jax import lax
from jax.experimental import pallas as pl
from jax.experimental.pallas import tpu as pltpu

# TV module constants (from TV.__init__)
TAU = 0.01
RHO = 1.99
SIGMA = 1.0 / TAU / 72.0
INV_1P_TAU = 1.0 / (1.0 + TAU)


@functools.lru_cache(maxsize=None)
def _roll_matches_jnp():
    """Tiny one-off probe: detect pltpu.roll's shift convention statically."""
    def k(x_ref, o_ref):
        o_ref[...] = pltpu.roll(x_ref[...], 1, 1)

    x = lax.broadcasted_iota(jnp.float32, (8, 128), 1)
    out = pl.pallas_call(
        k, out_shape=jax.ShapeDtypeStruct((8, 128), jnp.float32))(x)
    # jnp.roll convention -> out[0, 0] == 127 ; opposite convention -> 1.
    return bool(out[0, 0] > 64.0)


def _tv_kernel(lambd_ref, y_ref, out_ref, *,
               n_it, crit, w, sh_next_h, sh_next_w, sh_prev_h, sh_prev_w):
    H, L = y_ref.shape
    lambd = lambd_ref[0]
    y = y_ref[...]

    # loop-invariant terms (hoisted out of the iteration)
    ty = (TAU * INV_1P_TAU) * y
    crit2 = crit * crit

    # boundary masks: last row (H diff) and per-image last column (W diff)
    row_ids = lax.broadcasted_iota(jnp.int32, (H, L), 0)
    col_ids = lax.broadcasted_iota(jnp.int32, (H, L), 1)
    row_mask = (row_ids != (H - 1)).astype(jnp.float32)
    col_mask = ((col_ids % w) != (w - 1)).astype(jnp.float32)

    def cond(c):
        i, done, _, _, _ = c
        return jnp.logical_and(i < n_it, done == 0)

    def body(c):
        i, _, x2, u0, u1 = c

        # x = prox_tau_fx(x2 - tau * nablaT(u2), y)
        # u0's last row and u1's per-image last column stay exactly zero, so
        # the adjoint (backward) shifts need no boundary masking.
        div_u = (pltpu.roll(u0, sh_prev_h, 0) - u0
                 + pltpu.roll(u1, sh_prev_w, 1) - u1)
        x = INV_1P_TAU * (x2 - TAU * div_u) + ty

        # u = prox_sigma_g_conj(u2 + sigma * nabla(2x - x2), lambd)
        t = 2.0 * x - x2
        g0 = (pltpu.roll(t, sh_next_h, 0) - t) * row_mask   # forward diff H
        g1 = (pltpu.roll(t, sh_next_w, 1) - t) * col_mask   # forward diff W
        v0 = u0 + SIGMA * g0
        v1 = u1 + SIGMA * g1
        # u = v * min(lambd / |v|, 1)  -- rsqrt on the EUP, no full-array divide
        scale = jnp.minimum(lambd * lax.rsqrt(v0 * v0 + v1 * v1 + 1e-30), 1.0)

        x2n = x2 + RHO * (x - x2)
        u0n = u0 + RHO * (v0 * scale - u0)
        u1n = u1 + RHO * (v1 * scale - u1)

        # rel_err < crit  <=>  ||x2 - x2n||^2 < crit^2 * ||x2n + 1e-12||^2
        diff = x2 - x2n
        num2 = jnp.sum(diff * diff)
        den = x2n + 1e-12
        den2 = jnp.sum(den * den)
        done_n = jnp.logical_and(i > 1, num2 < crit2 * den2).astype(jnp.int32)
        return (i + 1, done_n, x2n, u0n, u1n)

    zeros = jnp.zeros_like(y)
    init = (jnp.array(0, jnp.int32), jnp.array(0, jnp.int32), y, zeros, zeros)
    _, _, x2_final, _, _ = lax.while_loop(cond, body, init)
    out_ref[...] = x2_final


def tv_prox(y, ths, n_it_max=1000, crit=1e-5):
    """Pallas TPU implementation of TV().forward(y, ths)."""
    # TODO(synk): persistent warm-start state (self.x2/self.u2 across calls) and
    # verbose printing are not kept; each call takes the restart=True path.
    b, c, h, w = y.shape
    n = b * c
    L = n * w
    # lane-dense packing: (h, n*w); lane index = image*w + column
    yf = jnp.transpose(y.reshape(n, h, w).astype(jnp.float32),
                       (1, 0, 2)).reshape(h, L)
    lambd = jnp.asarray([ths], dtype=jnp.float32)

    if _roll_matches_jnp():
        sh_next_h, sh_prev_h = h - 1, 1       # result[i] = x[i+1] / x[i-1]
        sh_next_w, sh_prev_w = L - 1, 1
    else:
        sh_next_h, sh_prev_h = 1, h - 1
        sh_next_w, sh_prev_w = 1, L - 1

    out = pl.pallas_call(
        functools.partial(
            _tv_kernel, n_it=n_it_max, crit=crit, w=w,
            sh_next_h=sh_next_h, sh_next_w=sh_next_w,
            sh_prev_h=sh_prev_h, sh_prev_w=sh_prev_w),
        out_shape=jax.ShapeDtypeStruct((h, L), jnp.float32),
        in_specs=[pl.BlockSpec(memory_space=pltpu.MemorySpace.SMEM),
                  pl.BlockSpec(memory_space=pltpu.MemorySpace.VMEM)],
        out_specs=pl.BlockSpec(memory_space=pltpu.MemorySpace.VMEM),
    )(lambd, yf)
    # TODO(synk): for large b*c*h*w, tile the batch over a parallel grid axis
    # (fits v7x's 64 MiB VMEM / uses both cores; convergence becomes per-block).
    return out.reshape(h, n, w).transpose(1, 0, 2).reshape(b, c, h, w)


# ---------- pure-JAX reference (mirrors the PyTorch code) ----------
def _nabla_ref(I):
    g0 = jnp.zeros_like(I).at[:, :, :-1, :].set(I[:, :, 1:, :] - I[:, :, :-1, :])
    g1 = jnp.zeros_like(I).at[:, :, :, :-1].set(I[:, :, :, 1:] - I[:, :, :, :-1])
    return jnp.stack([g0, g1], axis=-1)


def _nablaT_ref(G):
    b, c, h, w = G.shape[:-1]
    I = jnp.zeros((b, c, h, w), G.dtype)
    I = I.at[:, :, :-1].add(-G[:, :, :-1, :, 0])
    I = I.at[:, :, 1:].add(G[:, :, :-1, :, 0])
    I = I.at[:, :, :, :-1].add(-G[:, :, :, :-1, 1])
    I = I.at[:, :, :, 1:].add(G[:, :, :, :-1, 1])
    return I


def tv_ref(y, ths, n_it_max=1000, crit=1e-5):
    y = y.astype(jnp.float32)

    def body(i, carry):
        conv, x2, u2 = carry
        x = (x2 - TAU * _nablaT_ref(u2) + TAU * y) / (1.0 + TAU)
        v = u2 + SIGMA * _nabla_ref(2.0 * x - x2)
        denom = jnp.maximum(jnp.sqrt(jnp.sum(v ** 2, axis=-1)) / ths, 1.0)[..., None]
        u = v / denom
        x2n = x2 + RHO * (x - x2)
        u2n = u2 + RHO * (u - u2)
        rel = jnp.linalg.norm((x2 - x2n).ravel()) / jnp.linalg.norm(x2n.ravel() + 1e-12)
        newly = jnp.logical_and(i > 1, rel < crit)
        x2_out = jnp.where(conv, x2, x2n)
        u2_out = jnp.where(conv, u2, u2n)
        return (jnp.logical_or(conv, newly), x2_out, u2_out)

    init = (jnp.array(False), y, jnp.zeros((*y.shape, 2), jnp.float32))
    _, x2, _ = lax.fori_loop(0, n_it_max, body, init)
    return x2


if __name__ == "__main__":
    key = jax.random.PRNGKey(0)
    y = jax.random.normal(key, (2, 4, 16, 16), dtype=jnp.float32)
    ths = 0.1

    out = tv_prox(y, ths, n_it_max=1000, crit=1e-5)
    out = jax.block_until_ready(out)

    ref = jax.block_until_ready(tv_ref(y, ths, n_it_max=1000, crit=1e-5))
    max_err = float(jnp.max(jnp.abs(out - ref)))
    assert out.shape == y.shape and out.dtype == jnp.float32
    assert max_err < 2e-3, f"mismatch vs reference: {max_err}"
    print("KERNEL_OK")
</pallas_src>

<mosaic_0001>
module attributes {stable_mosaic.version = 11 : i64} {
  func.func @k(%arg0: memref<8x128xf32, #tpu.memory_space<vmem>>, %arg1: memref<8x128xf32, #tpu.memory_space<vmem>>) attributes {dimension_semantics = [], scalar_prefetch = 0 : i64, scratch_operands = 0 : i64, tpu.core_type = #tpu.core_type<tc>} {
    %c0 = arith.constant 0 : index
    %c0_0 = arith.constant 0 : index
    %0 = vector.load %arg0[%c0, %c0_0] : memref<8x128xf32, #tpu.memory_space<vmem>>, vector<8x128xf32>
    %c1_i32 = arith.constant 1 : i32
    %1 = tpu.dynamic_rotate %0 by %c1_i32 dim 1 : vector<8x128xf32>, i32 -> vector<8x128xf32>
    %c0_1 = arith.constant 0 : index
    %c0_2 = arith.constant 0 : index
    %2 = vector.load %arg1[%c0_1, %c0_2] : memref<8x128xf32, #tpu.memory_space<vmem>>, vector<8x128xf32>
    tpu.vector_store %arg1[%c0_1, %c0_2], %1 {strides = array<i32>} : memref<8x128xf32, #tpu.memory_space<vmem>>, vector<8x128xf32>,
    return
  }
}

</mosaic_0001>

<llo_original>
// kernel: tpu_custom_call.1
$region0: #{tpu_custom_call.1}
  #allocation0 [shape = 'u32[]', space=smem, size = 0x4, offset = 0x4, fixed_abs, tag = 'smem constant byte address 0x4 - core index']
  #allocation1 [shape = 'u32[72,128]{1,0:T(1,128)}', space=vmem, size = 0x9000, scoped, tag = 'internal scratch']
  %s0 = inlined_call_operand.hbm [shape: f32[8,128], index: 0, kind: input, shape index: {}]
  %s1 = inlined_call_operand.hbm [shape: f32[8,128], index: 1, kind: output, shape index: {}]
  %s2 = sld [smem:[#allocation0]]
  $region18: #{tpu_custom_call.1} parent=0
    _
  %s4 = ssub.s32 1, %s2
  %s5 = scalar_select 0, %s4, %s2
  $region1: #{tpu_custom_call.1} parent=0
    #allocation2 [shape = 'u8[4096]{0}', space=vmem, size = 0x1000, scoped, tag = 'input window, operand 0, single buffered']
    #allocation3 [shape = 's32[1]{0}', space=sflag, size = 0x4, scoped, tag = 'scoped memory for tpu_custom_call.1']
    #allocation4 [shape = 's32[1]{0}', space=sflag, size = 0x4, scoped, tag = 'scoped memory for tpu_custom_call.1']
    #allocation5 [shape = 'u8[4096]{0}', space=vmem, size = 0x1000, scoped, tag = 'output window, operand 0, single buffered']
    %6 = vsyncpa [#allocation3], 0
    %7 = vsyncpa [#allocation4], 0
    // Predicated region
    $region2: #{tpu_custom_call.1} parent=1 // pred_check
      _
    $region3: #{tpu_custom_call.1} parent=1 // pred_check_branch
      %9 = sbr.rel (0) target = $region5
    $region4: #{tpu_custom_call.1} parent=1 // pred_region
      %11 = vsyncadd [#allocation3], 0
      %s13 = sshll.u32 %s0, 4
      %s14 = int_to_ptr.hbm [resolvable:$true] %s13
      %s15 = sshll.u32 [#allocation2], 4
      %s16 = int_to_ptr.vmem [resolvable:$true] %s15
      %18 = dma.hbm_to_vmem [thread:$0]  %s14, 128, %s16, [#allocation3]
    $region5: #{tpu_custom_call.1} parent=1 // pred_fallthru
      _
    // Predicated region
    $region6: #{tpu_custom_call.1} parent=1 // pred_check
      _
    $region7: #{tpu_custom_call.1} parent=1 // pred_check_branch
      %20 = sbr.rel (0) target = $region9
    $region8: #{tpu_custom_call.1} parent=1 // pred_region
      %22 = dma.done [#allocation3], 128
    $region9: #{tpu_custom_call.1} parent=1 // pred_fallthru
      _
    %v23 = vld [vmem:[#allocation2] sm:$0xff]
    %24 = vrot.lane.b32.xlu0 %v23, 1
    %v25 = vpop.permute.xlu0 %24
    %26 = vst [vmem:[#allocation5] sm:$0xff] %v25
    // Predicated region
    $region10: #{tpu_custom_call.1} parent=1 // pred_check
      _
    $region11: #{tpu_custom_call.1} parent=1 // pred_check_branch
      %28 = sbr.rel (0) target = $region13
    $region12: #{tpu_custom_call.1} parent=1 // pred_region
      %30 = vsyncadd [#allocation4], 0
      %s32 = sshll.u32 [#allocation5], 4
      %s33 = int_to_ptr.vmem [resolvable:$true] %s32
      %s34 = sshll.u32 %s1, 4
      %s35 = int_to_ptr.hbm [resolvable:$true] %s34
      %37 = dma.vmem_to_hbm [thread:$0]  %s33, 128, %s35, [#allocation4]
    $region13: #{tpu_custom_call.1} parent=1 // pred_fallthru
      _
    // Predicated region
    $region14: #{tpu_custom_call.1} parent=1 // pred_check
      _
    $region15: #{tpu_custom_call.1} parent=1 // pred_check_branch
      %39 = sbr.rel (0) target = $region17
    $region16: #{tpu_custom_call.1} parent=1 // pred_region
      %41 = dma.done [#allocation4], 128
    $region17: #{tpu_custom_call.1} parent=1 // pred_fallthru
      _
    %42 = vsyncpa [#allocation3], 1
    %43 = vsyncpa [#allocation4], 1

</llo_original>
